<compile_context>
chip_gen: v7x
topology: tpu7x:2x2x1
jax: 0.10.0
libtpu: 0.0.40
codegen_flags: <defaults>
</compile_context>

<pallas_src>
import functools

import numpy as np
import jax
import jax.numpy as jnp
from jax import lax
from jax.experimental import pallas as pl
from jax.experimental.pallas import tpu as pltpu


def _birnn_kernel(xp_ref, slen_ref, h0_ref, whh_ref, out_ref, *, hidden_size, unroll):
    """Fused bidirectional tanh-RNN recurrence for one batch tile.

    xp_ref:   (T, TB, H2p) precomputed x @ W_ih^T + (b_ih + b_hh); lanes [0,H) are the
              forward direction at time i, lanes [H,2H) are the backward direction at
              time T-1-i (pre-reversed in the wrapper), lanes >= 2H are zero padding.
    slen_ref: (TB, 1)      int32 sequence lengths for this batch tile.
    h0_ref:   (TB, H2p)    effective initial hidden [h0_fwd | h0_bwd | 0-pad].
    whh_ref:  (H2p, H2p)   block-diagonal recurrent weight (already transposed).
    out_ref:  (T, TB, H2p) outputs; fwd half at time i, bwd half at time T-1-i
              (un-reversed in the wrapper), zero on padding.
    """
    T, TB, H2p = xp_ref.shape
    H = hidden_size

    whh = whh_ref[...]                                          # (H2p, H2p)

    # Hoisted broadcasts (JAX does not CSE broadcast_in_dim inside the loop).
    lane = lax.broadcasted_iota(jnp.int32, (TB, H2p), 1)
    is_fwd = lane < H                                           # fwd lanes; bwd+pad -> False
    slen = jnp.broadcast_to(slen_ref[...], (TB, H2p))           # (TB, H2p) int32
    # Valid loop indices: fwd lanes valid for i in [0, len); bwd lanes for i in [T-len, T).
    lo = jnp.where(is_fwd, 0, T - slen)                         # inclusive lower bound
    hi = jnp.where(is_fwd, slen, T)                             # exclusive upper bound

    def body(i, h):
        cand = jnp.tanh(xp_ref[i] + jnp.dot(h, whh, preferred_element_type=jnp.float32))
        valid = (i >= lo) & (i < hi)
        out_ref[i] = jnp.where(valid, cand, 0.0)
        # Hold the carry at its previous value (ultimately h0) across padding, so the
        # backward recurrence starts at t = len_b - 1 from the user-supplied h0.
        return jnp.where(valid, cand, h)

    lax.fori_loop(0, T, body, h0_ref[...], unroll=unroll)


def _device_kind():
    try:
        return jax.devices()[0].device_kind.lower()
    except Exception:
        return ""


def _choose_batch_tiling(B, T, H2p, vmem_budget, min_tiles):
    """Largest multiple-of-8 batch tile that fits the VMEM budget; >= min_tiles tiles."""
    Bp = -(-B // 8) * 8
    per_row = 2 * 2 * T * H2p * 4            # xp + out tiles, double-buffered, f32
    tb_cap = max(8, (vmem_budget // per_row) // 8 * 8)
    num_tiles = max(min_tiles, -(-Bp // tb_cap))
    num_tiles = min(num_tiles, max(1, Bp // 8))   # keep at least 8 batch rows per tile
    TB = -(-Bp // num_tiles)
    TB = -(-TB // 8) * 8
    Bp = num_tiles * TB
    return Bp, TB, num_tiles


def shifted_birnn(x, seqlens, h0, w_ih, w_hh, b_ih, b_hh):
    """JAX/Pallas equivalent of ShiftedBiRNN.forward.

    x:       (B, T, D) float32, batch-first inputs
    seqlens: (B,) int32, assumed max(seqlens) == T
    h0:      (2, B, H) float32 initial hidden (fwd, bwd)
    w_ih:    (2, H, D), w_hh: (2, H, H), b_ih/b_hh: (2, H)
    returns (shifted, output), both (B, T, 2H)
    """
    B, T, D = x.shape
    H = w_ih.shape[1]
    H2 = 2 * H
    H2p = max(128, -(-H2 // 128) * 128)        # lane-pad hidden dim to full 128-lane vregs

    # PackedRNN quirk: inputs are sorted by descending length (np.argsort(...)[::-1],
    # exactly as the module) but the supplied initial hidden is not re-sorted, so
    # sequence b effectively starts from h0[:, rank_of_b_in_sorted_order].
    order = jnp.argsort(seqlens)[::-1]
    inv = jnp.argsort(order)
    h0_eff = h0[:, inv, :].astype(jnp.float32)                                   # (2, B, H)

    x32 = x.astype(jnp.float32)

    # Hoist the input projection off the serial critical path: one matmul for both
    # directions with the biases folded in, then pre-reverse the backward half in time
    # so the kernel does a single dense xp_ref[i] load per step.
    w_in = jnp.concatenate([w_ih[0].T, w_ih[1].T], axis=1).astype(jnp.float32)   # (D, 2H)
    bias = jnp.concatenate([b_ih[0] + b_hh[0], b_ih[1] + b_hh[1]]).astype(jnp.float32)
    xp_all = jnp.einsum("btd,dh->tbh", x32, w_in) + bias                         # (T, B, 2H)
    xp = jnp.concatenate([xp_all[:, :, :H], xp_all[::-1, :, H:]], axis=-1)       # (T, B, 2H)

    h0_comb = jnp.concatenate([h0_eff[0], h0_eff[1]], axis=-1)                   # (B, 2H)

    # Generation-aware tiling: TB derived from an explicit VMEM budget; on v7x insist
    # on >= 2 batch tiles so ("parallel",) shards across both TensorCores.
    kind = _device_kind()
    is_v7 = ("v7" in kind) or ("7x" in kind)
    vmem_budget = (48 << 20) if is_v7 else (96 << 20)
    min_tiles = 2 if is_v7 else 1
    Bp, TB, num_tiles = _choose_batch_tiling(B, T, H2p, vmem_budget, min_tiles)

    # Lane-pad 2H -> H2p and batch-pad B -> Bp (pad rows get len=0, h0=0 -> inert zeros).
    xp_p = jnp.pad(xp, ((0, 0), (0, Bp - B), (0, H2p - H2)))
    h0_p = jnp.pad(h0_comb, ((0, Bp - B), (0, H2p - H2)))
    slen = jnp.pad(seqlens.astype(jnp.int32), (0, Bp - B)).reshape(Bp, 1)

    # Block-diagonal recurrent weight so both directions share one MXU dot.
    whh_bd = jnp.zeros((H2p, H2p), jnp.float32)
    whh_bd = whh_bd.at[:H, :H].set(w_hh[0].T.astype(jnp.float32))
    whh_bd = whh_bd.at[H:H2, H:H2].set(w_hh[1].T.astype(jnp.float32))

    # Unroll chosen jointly with TB so unrolled live (TB, H2p) values fit the vreg file.
    live_vregs = max(1, (TB * H2p) // 1024)
    if live_vregs <= 2:
        unroll = min(T, 8)
    elif live_vregs <= 8:
        unroll = min(T, 4)
    else:
        unroll = min(T, 2)

    kernel = functools.partial(_birnn_kernel, hidden_size=H, unroll=unroll)

    cost = pl.CostEstimate(
        flops=2 * Bp * T * H2p * H2p,
        transcendentals=Bp * T * H2p,
        bytes_accessed=2 * T * Bp * H2p * 4 + H2p * H2p * 4 + 2 * Bp * H2p * 4,
    )

    out_kern = pl.pallas_call(
        kernel,
        grid=(num_tiles,),
        in_specs=[
            pl.BlockSpec((T, TB, H2p), lambda i: (0, i, 0)),   # xp (fwd | time-rev bwd | pad)
            pl.BlockSpec((TB, 1), lambda i: (i, 0)),           # seqlens
            pl.BlockSpec((TB, H2p), lambda i: (i, 0)),         # h0 (fwd | bwd | pad)
            pl.BlockSpec((H2p, H2p), lambda i: (0, 0)),        # block-diag W_hh
        ],
        out_specs=pl.BlockSpec((T, TB, H2p), lambda i: (0, i, 0)),
        out_shape=jax.ShapeDtypeStruct((T, Bp, H2p), jnp.float32),
        compiler_params=pltpu.CompilerParams(
            dimension_semantics=("parallel",),
            vmem_limit_bytes=int(vmem_budget + (8 << 20)),
        ),
        cost_estimate=cost,
    )(xp_p, slen, h0_p, whh_bd)

    # Un-pad, un-reverse the backward half in time, go back to batch-first. The context
    # shift is derived from `output` with pure (fusible) XLA copies, as in the module.
    out_f = out_kern[:, :B, :H]                         # fwd output at time t
    out_b = out_kern[::-1, :B, H:H2]                    # bwd output at time t (un-reversed)
    output = jnp.transpose(jnp.concatenate([out_f, out_b], axis=-1), (1, 0, 2))  # (B, T, 2H)

    zeros = jnp.zeros((B, 1, H), jnp.float32)
    shifted = jnp.concatenate(
        [jnp.concatenate([zeros, output[:, :-1, :H]], axis=1),   # fwd shifted right
         jnp.concatenate([output[:, 1:, H:], zeros], axis=1)],   # bwd shifted left
        axis=-1)
    return shifted, output


def _ref_shifted_birnn(x, seqlens, h0, w_ih, w_hh, b_ih, b_hh):
    """Pure-JAX reference with identical math (sanity check)."""
    B, T, D = x.shape
    H = w_ih.shape[1]
    order = jnp.argsort(seqlens)[::-1]
    inv = jnp.argsort(order)
    h0e = h0[:, inv, :]
    mask = (jnp.arange(T)[None, :] < seqlens[:, None]).astype(jnp.float32)   # (B, T)
    b = b_ih + b_hh

    def step(d):
        def f(h, t):
            cand = jnp.tanh(x[:, t] @ w_ih[d].T + h @ w_hh[d].T + b[d])
            m = mask[:, t][:, None]
            return jnp.where(m > 0, cand, h), cand * m
        return f

    _, outs_f = lax.scan(step(0), h0e[0], jnp.arange(T))                      # (T, B, H)
    _, outs_b = lax.scan(step(1), h0e[1], jnp.arange(T)[::-1])                # reversed order
    outs_b = outs_b[::-1]
    output = jnp.concatenate([outs_f, outs_b], axis=-1).transpose(1, 0, 2)    # (B, T, 2H)
    z = jnp.zeros((B, 1, H), jnp.float32)
    sh_f = jnp.concatenate([z, output[:, :-1, :H]], axis=1)
    sh_b = jnp.concatenate([output[:, 1:, H:], z], axis=1)
    shifted = jnp.concatenate([sh_f, sh_b], axis=-1)
    return shifted, output


if __name__ == "__main__":
    # Small shapes consistent with the module: batch=2, seq=8, input_dim=8, hidden=32.
    B, T, D, H = 2, 8, 8, 32

    key = jax.random.PRNGKey(0)
    k_x, k_h, k_wih, k_whh, k_bih, k_bhh = jax.random.split(key, 6)

    x = jax.random.normal(k_x, (B, T, D), dtype=jnp.float32)
    seqlens = jnp.array([T, 5], dtype=jnp.int32)          # max(seqlens) == T (required)
    h0 = jax.random.normal(k_h, (2, B, H), dtype=jnp.float32)

    # nn.RNN(bidirectional=True) parameter shapes; uniform(-1/sqrt(H), 1/sqrt(H)).
    s = 1.0 / np.sqrt(H)
    w_ih = jax.random.uniform(k_wih, (2, H, D), minval=-s, maxval=s, dtype=jnp.float32)
    w_hh = jax.random.uniform(k_whh, (2, H, H), minval=-s, maxval=s, dtype=jnp.float32)
    b_ih = jax.random.uniform(k_bih, (2, H), minval=-s, maxval=s, dtype=jnp.float32)
    b_hh = jax.random.uniform(k_bhh, (2, H), minval=-s, maxval=s, dtype=jnp.float32)

    shifted, output = jax.jit(shifted_birnn)(x, seqlens, h0, w_ih, w_hh, b_ih, b_hh)
    jax.block_until_ready((shifted, output))

    ref_shifted, ref_output = _ref_shifted_birnn(x, seqlens, h0, w_ih, w_hh, b_ih, b_hh)
    np.testing.assert_allclose(np.asarray(output), np.asarray(ref_output), atol=1e-4, rtol=1e-4)
    np.testing.assert_allclose(np.asarray(shifted), np.asarray(ref_shifted), atol=1e-4, rtol=1e-4)

    assert shifted.shape == (B, T, 2 * H) and output.shape == (B, T, 2 * H)
    print("KERNEL_OK")
</pallas_src>

<mosaic_0001>
module attributes {stable_mosaic.version = 11 : i64} {
  func.func @_birnn_kernel(%arg0: i32, %arg1: memref<8x8x128xf32, #tpu.memory_space<vmem>>, %arg2: memref<8x1xi32, #tpu.memory_space<vmem>>, %arg3: memref<8x128xf32, #tpu.memory_space<vmem>>, %arg4: memref<128x128xf32, #tpu.memory_space<vmem>>, %arg5: memref<8x8x128xf32, #tpu.memory_space<vmem>>) attributes {dimension_semantics = [#tpu.dimension_semantics<parallel>], iteration_bounds = array<i64: 1>, scalar_prefetch = 0 : i64, scratch_operands = 0 : i64, tpu.core_type = #tpu.core_type<tc>, window_params = [{transform_indices = @transform_0, window_bounds = array<i64: 8, 8, 128>}, {transform_indices = @transform_1, window_bounds = array<i64: 8, 1>}, {transform_indices = @transform_2, window_bounds = array<i64: 8, 128>}, {pipeline_mode = #tpu.pipeline_mode<synchronous>, transform_indices = @transform_3, window_bounds = array<i64: 128, 128>}, {transform_indices = @transform_4, window_bounds = array<i64: 8, 8, 128>}]} {
    %c0 = arith.constant 0 : index
    %c0_0 = arith.constant 0 : index
    %0 = vector.load %arg4[%c0, %c0_0] : memref<128x128xf32, #tpu.memory_space<vmem>>, vector<128x128xf32>
    %1 = tpu.iota {dimensions = array<i32: 1>} : vector<8x128xi32>
    %c32_i32 = arith.constant 32 : i32
    %2 = vector.broadcast %c32_i32 : i32 to vector<8x128xi32>
    %3 = arith.cmpi slt, %1, %2 : vector<8x128xi32>
    %c0_1 = arith.constant 0 : index
    %c0_2 = arith.constant 0 : index
    %4 = vector.load %arg2[%c0_1, %c0_2] : memref<8x1xi32, #tpu.memory_space<vmem>>, vector<8x1xi32>
    %5 = vector.shape_cast %4 : vector<8x1xi32> to vector<8x1xi32>
    %6 = vector.broadcast %5 : vector<8x1xi32> to vector<8x128xi32>
    %c8_i32 = arith.constant 8 : i32
    %7 = vector.broadcast %c8_i32 : i32 to vector<8x128xi32>
    %8 = arith.subi %7, %6 : vector<8x128xi32>
    %c0_i32 = arith.constant 0 : i32
    %9 = vector.broadcast %c0_i32 : i32 to vector<8x128xi32>
    %10 = arith.select %3, %9, %8 : vector<8x128xi1>, vector<8x128xi32>
    %c8_i32_3 = arith.constant 8 : i32
    %11 = vector.broadcast %c8_i32_3 : i32 to vector<8x128xi32>
    %12 = arith.select %3, %6, %11 : vector<8x128xi1>, vector<8x128xi32>
    %c0_4 = arith.constant 0 : index
    %c0_5 = arith.constant 0 : index
    %13 = vector.load %arg3[%c0_4, %c0_5] : memref<8x128xf32, #tpu.memory_space<vmem>>, vector<8x128xf32>
    %c0_i32_6 = arith.constant 0 : i32
    %14 = arith.index_cast %c0_i32_6 : i32 to index
    %c0_7 = arith.constant 0 : index
    %c0_8 = arith.constant 0 : index
    %15 = vector.load %arg1[%14, %c0_7, %c0_8] : memref<8x8x128xf32, #tpu.memory_space<vmem>>, vector<1x8x128xf32>
    %16 = vector.shape_cast %15 : vector<1x8x128xf32> to vector<8x128xf32>
    %cst = arith.constant dense<0.000000e+00> : vector<8x128xf32>
    %17 = tpu.matmul %13, %0, %cst {dimension_numbers = #tpu.dot_dimension_numbers<[1], [0], [0], [1], [0, 0, 1, 1], [], []>} : vector<8x128xf32>, vector<128x128xf32>, vector<8x128xf32> -> vector<8x128xf32>
    %18 = arith.addf %16, %17 : vector<8x128xf32>
    %19 = math.tanh %18 : vector<8x128xf32>
    %20 = vector.broadcast %c0_i32_6 : i32 to vector<8x128xi32>
    %21 = arith.cmpi sge, %20, %10 : vector<8x128xi32>
    %22 = vector.broadcast %c0_i32_6 : i32 to vector<8x128xi32>
    %23 = arith.cmpi slt, %22, %12 : vector<8x128xi32>
    %24 = arith.andi %21, %23 : vector<8x128xi1>
    %cst_9 = arith.constant 0.000000e+00 : f32
    %25 = vector.broadcast %cst_9 : f32 to vector<8x128xf32>
    %26 = arith.select %24, %19, %25 : vector<8x128xi1>, vector<8x128xf32>
    %27 = arith.index_cast %c0_i32_6 : i32 to index
    %c0_10 = arith.constant 0 : index
    %c0_11 = arith.constant 0 : index
    %28 = vector.load %arg5[%27, %c0_10, %c0_11] : memref<8x8x128xf32, #tpu.memory_space<vmem>>, vector<1x8x128xf32>
    %29 = vector.shape_cast %28 : vector<1x8x128xf32> to vector<8x128xf32>
    %30 = vector.shape_cast %26 : vector<8x128xf32> to vector<1x8x128xf32>
    tpu.vector_store %arg5[%27, %c0_10, %c0_11], %30 {strides = array<i32>} : memref<8x8x128xf32, #tpu.memory_space<vmem>>, vector<1x8x128xf32>,
    %31 = arith.select %24, %19, %13 : vector<8x128xi1>, vector<8x128xf32>
    %c1_i32 = arith.constant 1 : i32
    %32 = arith.index_cast %c1_i32 : i32 to index
    %c0_12 = arith.constant 0 : index
    %c0_13 = arith.constant 0 : index
    %33 = vector.load %arg1[%32, %c0_12, %c0_13] : memref<8x8x128xf32, #tpu.memory_space<vmem>>, vector<1x8x128xf32>
    %34 = vector.shape_cast %33 : vector<1x8x128xf32> to vector<8x128xf32>
    %cst_14 = arith.constant dense<0.000000e+00> : vector<8x128xf32>
    %35 = tpu.matmul %31, %0, %cst_14 {dimension_numbers = #tpu.dot_dimension_numbers<[1], [0], [0], [1], [0, 0, 1, 1], [], []>} : vector<8x128xf32>, vector<128x128xf32>, vector<8x128xf32> -> vector<8x128xf32>
    %36 = arith.addf %34, %35 : vector<8x128xf32>
    %37 = math.tanh %36 : vector<8x128xf32>
    %38 = vector.broadcast %c1_i32 : i32 to vector<8x128xi32>
    %39 = arith.cmpi sge, %38, %10 : vector<8x128xi32>
    %40 = vector.broadcast %c1_i32 : i32 to vector<8x128xi32>
    %41 = arith.cmpi slt, %40, %12 : vector<8x128xi32>
    %42 = arith.andi %39, %41 : vector<8x128xi1>
    %cst_15 = arith.constant 0.000000e+00 : f32
    %43 = vector.broadcast %cst_15 : f32 to vector<8x128xf32>
    %44 = arith.select %42, %37, %43 : vector<8x128xi1>, vector<8x128xf32>
    %45 = arith.index_cast %c1_i32 : i32 to index
    %c0_16 = arith.constant 0 : index
    %c0_17 = arith.constant 0 : index
    %46 = vector.load %arg5[%45, %c0_16, %c0_17] : memref<8x8x128xf32, #tpu.memory_space<vmem>>, vector<1x8x128xf32>
    %47 = vector.shape_cast %46 : vector<1x8x128xf32> to vector<8x128xf32>
    %48 = vector.shape_cast %44 : vector<8x128xf32> to vector<1x8x128xf32>
    tpu.vector_store %arg5[%45, %c0_16, %c0_17], %48 {strides = array<i32>} : memref<8x8x128xf32, #tpu.memory_space<vmem>>, vector<1x8x128xf32>,
    %49 = arith.select %42, %37, %31 : vector<8x128xi1>, vector<8x128xf32>
    %c2_i32 = arith.constant 2 : i32
    %50 = arith.index_cast %c2_i32 : i32 to index
    %c0_18 = arith.constant 0 : index
    %c0_19 = arith.constant 0 : index
    %51 = vector.load %arg1[%50, %c0_18, %c0_19] : memref<8x8x128xf32, #tpu.memory_space<vmem>>, vector<1x8x128xf32>
    %52 = vector.shape_cast %51 : vector<1x8x128xf32> to vector<8x128xf32>
    %cst_20 = arith.constant dense<0.000000e+00> : vector<8x128xf32>
    %53 = tpu.matmul %49, %0, %cst_20 {dimension_numbers = #tpu.dot_dimension_numbers<[1], [0], [0], [1], [0, 0, 1, 1], [], []>} : vector<8x128xf32>, vector<128x128xf32>, vector<8x128xf32> -> vector<8x128xf32>
    %54 = arith.addf %52, %53 : vector<8x128xf32>
    %55 = math.tanh %54 : vector<8x128xf32>
    %56 = vector.broadcast %c2_i32 : i32 to vector<8x128xi32>
    %57 = arith.cmpi sge, %56, %10 : vector<8x128xi32>
    %58 = vector.broadcast %c2_i32 : i32 to vector<8x128xi32>
    %59 = arith.cmpi slt, %58, %12 : vector<8x128xi32>
    %60 = arith.andi %57, %59 : vector<8x128xi1>
    %cst_21 = arith.constant 0.000000e+00 : f32
    %61 = vector.broadcast %cst_21 : f32 to vector<8x128xf32>
    %62 = arith.select %60, %55, %61 : vector<8x128xi1>, vector<8x128xf32>
    %63 = arith.index_cast %c2_i32 : i32 to index
    %c0_22 = arith.constant 0 : index
    %c0_23 = arith.constant 0 : index
    %64 = vector.load %arg5[%63, %c0_22, %c0_23] : memref<8x8x128xf32, #tpu.memory_space<vmem>>, vector<1x8x128xf32>
    %65 = vector.shape_cast %64 : vector<1x8x128xf32> to vector<8x128xf32>
    %66 = vector.shape_cast %62 : vector<8x128xf32> to vector<1x8x128xf32>
    tpu.vector_store %arg5[%63, %c0_22, %c0_23], %66 {strides = array<i32>} : memref<8x8x128xf32, #tpu.memory_space<vmem>>, vector<1x8x128xf32>,
    %67 = arith.select %60, %55, %49 : vector<8x128xi1>, vector<8x128xf32>
    %c3_i32 = arith.constant 3 : i32
    %68 = arith.index_cast %c3_i32 : i32 to index
    %c0_24 = arith.constant 0 : index
    %c0_25 = arith.constant 0 : index
    %69 = vector.load %arg1[%68, %c0_24, %c0_25] : memref<8x8x128xf32, #tpu.memory_space<vmem>>, vector<1x8x128xf32>
    %70 = vector.shape_cast %69 : vector<1x8x128xf32> to vector<8x128xf32>
    %cst_26 = arith.constant dense<0.000000e+00> : vector<8x128xf32>
    %71 = tpu.matmul %67, %0, %cst_26 {dimension_numbers = #tpu.dot_dimension_numbers<[1], [0], [0], [1], [0, 0, 1, 1], [], []>} : vector<8x128xf32>, vector<128x128xf32>, vector<8x128xf32> -> vector<8x128xf32>
    %72 = arith.addf %70, %71 : vector<8x128xf32>
    %73 = math.tanh %72 : vector<8x128xf32>
    %74 = vector.broadcast %c3_i32 : i32 to vector<8x128xi32>
    %75 = arith.cmpi sge, %74, %10 : vector<8x128xi32>
    %76 = vector.broadcast %c3_i32 : i32 to vector<8x128xi32>
    %77 = arith.cmpi slt, %76, %12 : vector<8x128xi32>
    %78 = arith.andi %75, %77 : vector<8x128xi1>
    %cst_27 = arith.constant 0.000000e+00 : f32
    %79 = vector.broadcast %cst_27 : f32 to vector<8x128xf32>
    %80 = arith.select %78, %73, %79 : vector<8x128xi1>, vector<8x128xf32>
    %81 = arith.index_cast %c3_i32 : i32 to index
    %c0_28 = arith.constant 0 : index
    %c0_29 = arith.constant 0 : index
    %82 = vector.load %arg5[%81, %c0_28, %c0_29] : memref<8x8x128xf32, #tpu.memory_space<vmem>>, vector<1x8x128xf32>
    %83 = vector.shape_cast %82 : vector<1x8x128xf32> to vector<8x128xf32>
    %84 = vector.shape_cast %80 : vector<8x128xf32> to vector<1x8x128xf32>
    tpu.vector_store %arg5[%81, %c0_28, %c0_29], %84 {strides = array<i32>} : memref<8x8x128xf32, #tpu.memory_space<vmem>>, vector<1x8x128xf32>,
    %85 = arith.select %78, %73, %67 : vector<8x128xi1>, vector<8x128xf32>
    %c4_i32 = arith.constant 4 : i32
    %86 = arith.index_cast %c4_i32 : i32 to index
    %c0_30 = arith.constant 0 : index
    %c0_31 = arith.constant 0 : index
    %87 = vector.load %arg1[%86, %c0_30, %c0_31] : memref<8x8x128xf32, #tpu.memory_space<vmem>>, vector<1x8x128xf32>
    %88 = vector.shape_cast %87 : vector<1x8x128xf32> to vector<8x128xf32>
    %cst_32 = arith.constant dense<0.000000e+00> : vector<8x128xf32>
    %89 = tpu.matmul %85, %0, %cst_32 {dimension_numbers = #tpu.dot_dimension_numbers<[1], [0], [0], [1], [0, 0, 1, 1], [], []>} : vector<8x128xf32>, vector<128x128xf32>, vector<8x128xf32> -> vector<8x128xf32>
    %90 = arith.addf %88, %89 : vector<8x128xf32>
    %91 = math.tanh %90 : vector<8x128xf32>
    %92 = vector.broadcast %c4_i32 : i32 to vector<8x128xi32>
    %93 = arith.cmpi sge, %92, %10 : vector<8x128xi32>
    %94 = vector.broadcast %c4_i32 : i32 to vector<8x128xi32>
    %95 = arith.cmpi slt, %94, %12 : vector<8x128xi32>
    %96 = arith.andi %93, %95 : vector<8x128xi1>
    %cst_33 = arith.constant 0.000000e+00 : f32
    %97 = vector.broadcast %cst_33 : f32 to vector<8x128xf32>
    %98 = arith.select %96, %91, %97 : vector<8x128xi1>, vector<8x128xf32>
    %99 = arith.index_cast %c4_i32 : i32 to index
    %c0_34 = arith.constant 0 : index
    %c0_35 = arith.constant 0 : index
    %100 = vector.load %arg5[%99, %c0_34, %c0_35] : memref<8x8x128xf32, #tpu.memory_space<vmem>>, vector<1x8x128xf32>
    %101 = vector.shape_cast %100 : vector<1x8x128xf32> to vector<8x128xf32>
    %102 = vector.shape_cast %98 : vector<8x128xf32> to vector<1x8x128xf32>
    tpu.vector_store %arg5[%99, %c0_34, %c0_35], %102 {strides = array<i32>} : memref<8x8x128xf32, #tpu.memory_space<vmem>>, vector<1x8x128xf32>,
    %103 = arith.select %96, %91, %85 : vector<8x128xi1>, vector<8x128xf32>
    %c5_i32 = arith.constant 5 : i32
    %104 = arith.index_cast %c5_i32 : i32 to index
    %c0_36 = arith.constant 0 : index
    %c0_37 = arith.constant 0 : index
    %105 = vector.load %arg1[%104, %c0_36, %c0_37] : memref<8x8x128xf32, #tpu.memory_space<vmem>>, vector<1x8x128xf32>
    %106 = vector.shape_cast %105 : vector<1x8x128xf32> to vector<8x128xf32>
    %cst_38 = arith.constant dense<0.000000e+00> : vector<8x128xf32>
    %107 = tpu.matmul %103, %0, %cst_38 {dimension_numbers = #tpu.dot_dimension_numbers<[1], [0], [0], [1], [0, 0, 1, 1], [], []>} : vector<8x128xf32>, vector<128x128xf32>, vector<8x128xf32> -> vector<8x128xf32>
    %108 = arith.addf %106, %107 : vector<8x128xf32>
    %109 = math.tanh %108 : vector<8x128xf32>
    %110 = vector.broadcast %c5_i32 : i32 to vector<8x128xi32>
    %111 = arith.cmpi sge, %110, %10 : vector<8x128xi32>
    %112 = vector.broadcast %c5_i32 : i32 to vector<8x128xi32>
    %113 = arith.cmpi slt, %112, %12 : vector<8x128xi32>
    %114 = arith.andi %111, %113 : vector<8x128xi1>
    %cst_39 = arith.constant 0.000000e+00 : f32
    %115 = vector.broadcast %cst_39 : f32 to vector<8x128xf32>
    %116 = arith.select %114, %109, %115 : vector<8x128xi1>, vector<8x128xf32>
    %117 = arith.index_cast %c5_i32 : i32 to index
    %c0_40 = arith.constant 0 : index
    %c0_41 = arith.constant 0 : index
    %118 = vector.load %arg5[%117, %c0_40, %c0_41] : memref<8x8x128xf32, #tpu.memory_space<vmem>>, vector<1x8x128xf32>
    %119 = vector.shape_cast %118 : vector<1x8x128xf32> to vector<8x128xf32>
    %120 = vector.shape_cast %116 : vector<8x128xf32> to vector<1x8x128xf32>
    tpu.vector_store %arg5[%117, %c0_40, %c0_41], %120 {strides = array<i32>} : memref<8x8x128xf32, #tpu.memory_space<vmem>>, vector<1x8x128xf32>,
    %121 = arith.select %114, %109, %103 : vector<8x128xi1>, vector<8x128xf32>
    %c6_i32 = arith.constant 6 : i32
    %122 = arith.index_cast %c6_i32 : i32 to index
    %c0_42 = arith.constant 0 : index
    %c0_43 = arith.constant 0 : index
    %123 = vector.load %arg1[%122, %c0_42, %c0_43] : memref<8x8x128xf32, #tpu.memory_space<vmem>>, vector<1x8x128xf32>
    %124 = vector.shape_cast %123 : vector<1x8x128xf32> to vector<8x128xf32>
    %cst_44 = arith.constant dense<0.000000e+00> : vector<8x128xf32>
    %125 = tpu.matmul %121, %0, %cst_44 {dimension_numbers = #tpu.dot_dimension_numbers<[1], [0], [0], [1], [0, 0, 1, 1], [], []>} : vector<8x128xf32>, vector<128x128xf32>, vector<8x128xf32> -> vector<8x128xf32>
    %126 = arith.addf %124, %125 : vector<8x128xf32>
    %127 = math.tanh %126 : vector<8x128xf32>
    %128 = vector.broadcast %c6_i32 : i32 to vector<8x128xi32>
    %129 = arith.cmpi sge, %128, %10 : vector<8x128xi32>
    %130 = vector.broadcast %c6_i32 : i32 to vector<8x128xi32>
    %131 = arith.cmpi slt, %130, %12 : vector<8x128xi32>
    %132 = arith.andi %129, %131 : vector<8x128xi1>
    %cst_45 = arith.constant 0.000000e+00 : f32
    %133 = vector.broadcast %cst_45 : f32 to vector<8x128xf32>
    %134 = arith.select %132, %127, %133 : vector<8x128xi1>, vector<8x128xf32>
    %135 = arith.index_cast %c6_i32 : i32 to index
    %c0_46 = arith.constant 0 : index
    %c0_47 = arith.constant 0 : index
    %136 = vector.load %arg5[%135, %c0_46, %c0_47] : memref<8x8x128xf32, #tpu.memory_space<vmem>>, vector<1x8x128xf32>
    %137 = vector.shape_cast %136 : vector<1x8x128xf32> to vector<8x128xf32>
    %138 = vector.shape_cast %134 : vector<8x128xf32> to vector<1x8x128xf32>
    tpu.vector_store %arg5[%135, %c0_46, %c0_47], %138 {strides = array<i32>} : memref<8x8x128xf32, #tpu.memory_space<vmem>>, vector<1x8x128xf32>,
    %139 = arith.select %132, %127, %121 : vector<8x128xi1>, vector<8x128xf32>
    %c7_i32 = arith.constant 7 : i32
    %140 = arith.index_cast %c7_i32 : i32 to index
    %c0_48 = arith.constant 0 : index
    %c0_49 = arith.constant 0 : index
    %141 = vector.load %arg1[%140, %c0_48, %c0_49] : memref<8x8x128xf32, #tpu.memory_space<vmem>>, vector<1x8x128xf32>
    %142 = vector.shape_cast %141 : vector<1x8x128xf32> to vector<8x128xf32>
    %cst_50 = arith.constant dense<0.000000e+00> : vector<8x128xf32>
    %143 = tpu.matmul %139, %0, %cst_50 {dimension_numbers = #tpu.dot_dimension_numbers<[1], [0], [0], [1], [0, 0, 1, 1], [], []>} : vector<8x128xf32>, vector<128x128xf32>, vector<8x128xf32> -> vector<8x128xf32>
    %144 = arith.addf %142, %143 : vector<8x128xf32>
    %145 = math.tanh %144 : vector<8x128xf32>
    %146 = vector.broadcast %c7_i32 : i32 to vector<8x128xi32>
    %147 = arith.cmpi sge, %146, %10 : vector<8x128xi32>
    %148 = vector.broadcast %c7_i32 : i32 to vector<8x128xi32>
    %149 = arith.cmpi slt, %148, %12 : vector<8x128xi32>
    %150 = arith.andi %147, %149 : vector<8x128xi1>
    %cst_51 = arith.constant 0.000000e+00 : f32
    %151 = vector.broadcast %cst_51 : f32 to vector<8x128xf32>
    %152 = arith.select %150, %145, %151 : vector<8x128xi1>, vector<8x128xf32>
    %153 = arith.index_cast %c7_i32 : i32 to index
    %c0_52 = arith.constant 0 : index
    %c0_53 = arith.constant 0 : index
    %154 = vector.load %arg5[%153, %c0_52, %c0_53] : memref<8x8x128xf32, #tpu.memory_space<vmem>>, vector<1x8x128xf32>
    %155 = vector.shape_cast %154 : vector<1x8x128xf32> to vector<8x128xf32>
    %156 = vector.shape_cast %152 : vector<8x128xf32> to vector<1x8x128xf32>
    tpu.vector_store %arg5[%153, %c0_52, %c0_53], %156 {strides = array<i32>} : memref<8x8x128xf32, #tpu.memory_space<vmem>>, vector<1x8x128xf32>,
    %157 = arith.select %150, %145, %139 : vector<8x128xi1>, vector<8x128xf32>
    %c8_i32_54 = arith.constant 8 : i32
    return
  }
  func.func @transform_0(%arg0: i32) -> (i32, i32, i32) {
    %c0_i32 = arith.constant 0 : i32
    %c0_i32_0 = arith.constant 0 : i32
    %c0_i32_1 = arith.constant 0 : i32
    return %c0_i32, %arg0, %c0_i32_0 : i32, i32, i32
  }
  func.func @transform_1(%arg0: i32) -> (i32, i32) {
    %c0_i32 = arith.constant 0 : i32
    %c0_i32_0 = arith.constant 0 : i32
    return %arg0, %c0_i32 : i32, i32
  }
  func.func @transform_2(%arg0: i32) -> (i32, i32) {
    %c0_i32 = arith.constant 0 : i32
    %c0_i32_0 = arith.constant 0 : i32
    return %arg0, %c0_i32 : i32, i32
  }
  func.func @transform_3(%arg0: i32) -> (i32, i32) {
    %c0_i32 = arith.constant 0 : i32
    %c0_i32_0 = arith.constant 0 : i32
    %c0_i32_1 = arith.constant 0 : i32
    return %c0_i32, %c0_i32_0 : i32, i32
  }
  func.func @transform_4(%arg0: i32) -> (i32, i32, i32) {
    %c0_i32 = arith.constant 0 : i32
    %c0_i32_0 = arith.constant 0 : i32
    %c0_i32_1 = arith.constant 0 : i32
    return %c0_i32, %arg0, %c0_i32_0 : i32, i32, i32
  }
}

</mosaic_0001>

<llo_original>
// kernel: shifted_birnn.1
$region0: #{shifted_birnn.1}
  #allocation0 [shape = 'u32[]', space=smem, size = 0x4, offset = 0x4, fixed_abs, tag = 'smem constant byte address 0x4 - core index']
  #allocation1 [shape = 'u32[144,128]{1,0:T(1,128)}', space=vmem, size = 0x12000, scoped, tag = 'internal scratch']
  %s0 = inlined_call_operand.hbm [shape: f32[8,8,128], index: 0, kind: input, shape index: {}]
  %s1 = inlined_call_operand.hbm [shape: s32[8,1], index: 1, kind: input, shape index: {}]
  %s2 = inlined_call_operand.hbm [shape: f32[8,128], index: 2, kind: input, shape index: {}]
  %s3 = inlined_call_operand.hbm [shape: f32[128,128], index: 3, kind: input, shape index: {}]
  %s4 = inlined_call_operand.hbm [shape: f32[8,8,128], index: 4, kind: output, shape index: {}]
  %s5 = sld [smem:[#allocation0]]
  $region42: #{shifted_birnn.1} parent=0
    _
  %s7 = ssub.s32 1, %s5
  %s8 = scalar_select 0, %s7, %s5
  $region1: #{shifted_birnn.1} parent=0
    #allocation2 [shape = 'u8[32768]{0}', space=vmem, size = 0x8000, scoped, tag = 'input window, operand 0, single buffered']
    #allocation3 [shape = 's32[1]{0}', space=sflag, size = 0x4, scoped, tag = 'scoped memory for shifted_birnn.1']
    #allocation4 [shape = 's32[1]{0}', space=sflag, size = 0x4, scoped, tag = 'scoped memory for shifted_birnn.1']
    #allocation5 [shape = 'u8[4096]{0}', space=vmem, size = 0x1000, scoped, tag = 'input window, operand 1, single buffered']
    #allocation6 [shape = 's32[1]{0}', space=sflag, size = 0x4, scoped, tag = 'scoped memory for shifted_birnn.1']
    #allocation7 [shape = 'u8[4096]{0}', space=vmem, size = 0x1000, scoped, tag = 'input window, operand 2, single buffered']
    #allocation8 [shape = 'u8[65536]{0}', space=vmem, size = 0x10000, scoped, tag = 'input window, operand 3, single buffered']
    #allocation9 [shape = 's32[1]{0}', space=sflag, size = 0x4, scoped, tag = 'scoped memory for shifted_birnn.1']
    #allocation10 [shape = 'u8[32768]{0}', space=vmem, size = 0x8000, scoped, tag = 'output window, operand 0, single buffered']
    %9 = vsyncpa [#allocation3], 0
    %10 = vsyncpa [#allocation6], 0
    %11 = vsyncpa [#allocation9], 0
    %12 = vsyncpa [#allocation4], 0
    // Predicated region
    $region2: #{shifted_birnn.1} parent=1 // pred_check
      _
    $region3: #{shifted_birnn.1} parent=1 // pred_check_branch
      %14 = sbr.rel (0) target = $region5
    $region4: #{shifted_birnn.1} parent=1 // pred_region
      %s16 = ssub.s32 1024, 1024
      %17 = vsyncadd [#allocation3], %s16
      %s18 = sshll.u32 [#allocation2], 4
      %s19 = int_to_ptr.vmem [resolvable:$true] %s18
      %24 = dma.hbm_to_vmem [thread:$0]  %s0, 1024, %s19, [#allocation3], 128, 128, 8
    $region5: #{shifted_birnn.1} parent=1 // pred_fallthru
      _
    // Predicated region
    $region6: #{shifted_birnn.1} parent=1 // pred_check
      _
    $region7: #{shifted_birnn.1} parent=1 // pred_check_branch
      %26 = sbr.rel (0) target = $region9
    $region8: #{shifted_birnn.1} parent=1 // pred_region
      %s28 = ssub.s32 128, 128
      %29 = vsyncadd [#allocation6], %s28
      %s31 = sshll.u32 [#allocation5], 4
      %s32 = int_to_ptr.vmem [resolvable:$true] %s31
      %34 = dma.hbm_to_vmem [thread:$0]  %s1, 128, %s32, [#allocation6]
    $region9: #{shifted_birnn.1} parent=1 // pred_fallthru
      _
    // Predicated region
    $region10: #{shifted_birnn.1} parent=1 // pred_check
      _
    $region11: #{shifted_birnn.1} parent=1 // pred_check_branch
      %36 = sbr.rel (0) target = $region13
    $region12: #{shifted_birnn.1} parent=1 // pred_region
      %s38 = ssub.s32 128, 128
      %39 = vsyncadd [#allocation6], %s38
      %s41 = sshll.u32 [#allocation7], 4
      %s42 = int_to_ptr.vmem [resolvable:$true] %s41
      %44 = dma.hbm_to_vmem [thread:$0]  %s2, 128, %s42, [#allocation6]
    $region13: #{shifted_birnn.1} parent=1 // pred_fallthru
      _
    // Predicated region
    $region14: #{shifted_birnn.1} parent=1 // pred_check
      _
    $region15: #{shifted_birnn.1} parent=1 // pred_check_branch
      %46 = sbr.rel (0) target = $region17
    $region16: #{shifted_birnn.1} parent=1 // pred_region
      %s48 = ssub.s32 2048, 2048
      %49 = vsyncadd [#allocation9], %s48
      %s50 = sshll.u32 [#allocation8], 4
      %s51 = int_to_ptr.vmem [resolvable:$true] %s50
      %56 = dma.hbm_to_vmem [thread:$0]  %s3, 2048, %s51, [#allocation9], 128, 128, 8
    $region17: #{shifted_birnn.1} parent=1 // pred_fallthru
      _
    // Predicated region
    $region18: #{shifted_birnn.1} parent=1 // pred_check
      _
    $region19: #{shifted_birnn.1} parent=1 // pred_check_branch
      %58 = sbr.rel (0) target = $region21
    $region20: #{shifted_birnn.1} parent=1 // pred_region
      %59 = dma.done [#allocation3], 1024
    $region21: #{shifted_birnn.1} parent=1 // pred_fallthru
      _
    // Predicated region
    $region22: #{shifted_birnn.1} parent=1 // pred_check
      _
    $region23: #{shifted_birnn.1} parent=1 // pred_check_branch
      %61 = sbr.rel (0) target = $region25
    $region24: #{shifted_birnn.1} parent=1 // pred_region
      %62 = dma.done [#allocation6], 128
    $region25: #{shifted_birnn.1} parent=1 // pred_fallthru
      _
    // Predicated region
    $region26: #{shifted_birnn.1} parent=1 // pred_check
      _
    $region27: #{shifted_birnn.1} parent=1 // pred_check_branch
      %64 = sbr.rel (0) target = $region29
    $region28: #{shifted_birnn.1} parent=1 // pred_region
      %65 = dma.done [#allocation6], 128
    $region29: #{shifted_birnn.1} parent=1 // pred_fallthru
      _
    // Predicated region
    $region30: #{shifted_birnn.1} parent=1 // pred_check
      _
    $region31: #{shifted_birnn.1} parent=1 // pred_check_branch
      %67 = sbr.rel (0) target = $region33
    $region32: #{shifted_birnn.1} parent=1 // pred_region
      %68 = dma.done [#allocation9], 2048
    $region33: #{shifted_birnn.1} parent=1 // pred_fallthru
      _
    %v69 = vld [vmem:[#allocation8] sm:$0xff]
    %v70 = vld [vmem:[#allocation8 + $0x8] sm:$0xff]
    %v71 = vld [vmem:[#allocation8 + $0x10] sm:$0xff]
    %v72 = vld [vmem:[#allocation8 + $0x18] sm:$0xff]
    %v73 = vld [vmem:[#allocation8 + $0x20] sm:$0xff]
    %v74 = vld [vmem:[#allocation8 + $0x28] sm:$0xff]
    %v75 = vld [vmem:[#allocation8 + $0x30] sm:$0xff]
    %v76 = vld [vmem:[#allocation8 + $0x38] sm:$0xff]
    %v77 = vld [vmem:[#allocation8 + $0x40] sm:$0xff]
    %v78 = vld [vmem:[#allocation8 + $0x48] sm:$0xff]
    %v79 = vld [vmem:[#allocation8 + $0x50] sm:$0xff]
    %v80 = vld [vmem:[#allocation8 + $0x58] sm:$0xff]
    %v81 = vld [vmem:[#allocation8 + $0x60] sm:$0xff]
    %v82 = vld [vmem:[#allocation8 + $0x68] sm:$0xff]
    %v83 = vld [vmem:[#allocation8 + $0x70] sm:$0xff]
    %v84 = vld [vmem:[#allocation8 + $0x78] sm:$0xff]
    %v85 = vlaneseq
    %v86 = vand.u32 %v85, 127
    %vm87 = vcmp.lt.s32.totalorder %v86, 32
    %v88 = vld [vmem:[#allocation5] sm:$0xff]
    %89 = vset.pattern.permute.xlu0 0
    %90 = vperm.xlu0 %89, %v88
    %v91 = vpop.permute.xlu0 %90
    %v92 = vsub.s32 8, %v91
    %v93 = vsel %vm87, 0, %v92
    %v94 = vsel %vm87, %v91, 8
    %v95 = vld [vmem:[#allocation7] sm:$0xff]
    %v96 = vld [vmem:[#allocation2] sm:$0xff]
    %97 = vmatprep.subr.mxu0 0.0
    %98 = vmatpush1.msra.mxu0 %v69
    %99 = vmatprep.subr.mxu0 0.0
    %100 = vmatpush1.msra.mxu0 %v70
    %101 = vmatprep.subr.mxu0 0.0
    %102 = vmatpush1.msra.mxu0 %v71
    %103 = vmatprep.subr.mxu0 0.0
    %104 = vmatpush1.msra.mxu0 %v72
    %105 = vmatprep.subr.mxu0 0.0
    %106 = vmatpush1.msra.mxu0 %v73
    %107 = vmatprep.subr.mxu0 0.0
    %108 = vmatpush1.msra.mxu0 %v74
    %109 = vmatprep.subr.mxu0 0.0
    %110 = vmatpush1.msra.mxu0 %v75
    %111 = vmatprep.subr.mxu0 0.0
    %112 = vmatpush1.msra.mxu0 %v76
    %113 = vmatprep.subr.mxu0 0.0
    %114 = vmatpush1.msra.mxu0 %v77
    %115 = vmatprep.subr.mxu0 0.0
    %116 = vmatpush1.msra.mxu0 %v78
    %117 = vmatprep.subr.mxu0 0.0
    %118 = vmatpush1.msra.mxu0 %v79
    %119 = vmatprep.subr.mxu0 0.0
    %120 = vmatpush1.msra.mxu0 %v80
    %121 = vmatprep.subr.mxu0 0.0
    %122 = vmatpush1.msra.mxu0 %v81
    %123 = vmatprep.subr.mxu0 0.0
    %124 = vmatpush1.msra.mxu0 %v82
    %125 = vmatprep.subr.mxu0 0.0
    %126 = vmatpush1.msra.mxu0 %v83
    %127 = vmatprep.subr.mxu0 0.0
    %128 = vmatpush1.msra.mxu0 %v84
    %129 = vmatprep.subr.mxu0 0.0
    %130 = vmatpush1.msra.mxu0 0.0
    %131 = vmatprep.subr.mxu0 0.0
    %132 = vmatpush1.msra.mxu0 0.0
    %133 = vmatprep.subr.mxu0 0.0
    %134 = vmatpush1.msra.mxu0 0.0
    %135 = vmatprep.subr.mxu0 0.0
    %136 = vmatpush1.msra.mxu0 0.0
    %137 = vmatprep.subr.mxu0 0.0
    %138 = vmatpush1.msra.mxu0 0.0
    %139 = vmatprep.subr.mxu0 0.0
    %140 = vmatpush1.msra.mxu0 0.0
    %141 = vmatprep.subr.mxu0 0.0
    %142 = vmatpush1.msra.mxu0 0.0
    %143 = vmatprep.subr.mxu0 0.0
    %144 = vmatpush1.msra.mxu0 0.0
    %145 = vmatprep.subr.mxu0 0.0
    %146 = vmatpush1.msra.mxu0 0.0
    %147 = vmatprep.subr.mxu0 0.0
    %148 = vmatpush1.msra.mxu0 0.0
    %149 = vmatprep.subr.mxu0 0.0
    %150 = vmatpush1.msra.mxu0 0.0
    %151 = vmatprep.subr.mxu0 0.0
    %152 = vmatpush1.msra.mxu0 0.0
    %153 = vmatprep.subr.mxu0 0.0
    %154 = vmatpush1.msra.mxu0 0.0
    %155 = vmatprep.subr.mxu0 0.0
    %156 = vmatpush1.msra.mxu0 0.0
    %157 = vmatprep.subr.mxu0 0.0
    %158 = vmatpush1.msra.mxu0 0.0
    %159 = vmatprep.subr.mxu0 0.0
    %160 = vmatpush1.msra.mxu0 0.0
    %161 = vmatprep.mubr.f32.mxu0 0.0
    %162 = vmatmul.mubr.f32.gmra.mrb[0].mxu0 %v95
    %v163 = vpop.f32.mrb[0].mxu0
    %v164 = vadd.f32 0.0, %v163
    %v165 = vpop.f32.mrb[0].mxu0
    %166 = vdwg.mxu0
    %v167 = vadd.f32 %v96, %v164
    %v168 = vtanh.pop %v167
    %vm169 = vcmp.le.s32.totalorder %v93, 0
    %vm170 = vcmp.gt.s32.totalorder %v94, 0
    %vm171 = vmand %vm169, %vm170
    %v172 = vsel %vm171, %v168, 0.0
    %173 = vst [vmem:[#allocation10] sm:$0xff] %v172
    %v174 = vsel %vm171, %v168, %v95
    %s175 = scalar_lea.vmem [#allocation2], 8
    %v176 = vld [vmem:[%s175] sm:$0xff]
    %177 = vmatprep.subr.mxu0 0.0
    %178 = vmatpush1.msra.mxu0 %v69
    %179 = vmatprep.subr.mxu0 0.0
    %180 = vmatpush1.msra.mxu0 %v70
    %181 = vmatprep.subr.mxu0 0.0
    %182 = vmatpush1.msra.mxu0 %v71
    %183 = vmatprep.subr.mxu0 0.0
    %184 = vmatpush1.msra.mxu0 %v72
    %185 = vmatprep.subr.mxu0 0.0
    %186 = vmatpush1.msra.mxu0 %v73
    %187 = vmatprep.subr.mxu0 0.0
    %188 = vmatpush1.msra.mxu0 %v74
    %189 = vmatprep.subr.mxu0 0.0
    %190 = vmatpush1.msra.mxu0 %v75
    %191 = vmatprep.subr.mxu0 0.0
    %192 = vmatpush1.msra.mxu0 %v76
    %193 = vmatprep.subr.mxu0 0.0
    %194 = vmatpush1.msra.mxu0 %v77
    %195 = vmatprep.subr.mxu0 0.0
    %196 = vmatpush1.msra.mxu0 %v78
    %197 = vmatprep.subr.mxu0 0.0
    %198 = vmatpush1.msra.mxu0 %v79
    %199 = vmatprep.subr.mxu0 0.0
    %200 = vmatpush1.msra.mxu0 %v80
    %201 = vmatprep.subr.mxu0 0.0
    %202 = vmatpush1.msra.mxu0 %v81
    %203 = vmatprep.subr.mxu0 0.0
    %204 = vmatpush1.msra.mxu0 %v82
    %205 = vmatprep.subr.mxu0 0.0
    %206 = vmatpush1.msra.mxu0 %v83
    %207 = vmatprep.subr.mxu0 0.0
    %208 = vmatpush1.msra.mxu0 %v84
    %209 = vmatprep.subr.mxu0 0.0
    %210 = vmatpush1.msra.mxu0 0.0
    %211 = vmatprep.subr.mxu0 0.0
    %212 = vmatpush1.msra.mxu0 0.0
    %213 = vmatprep.subr.mxu0 0.0
    %214 = vmatpush1.msra.mxu0 0.0
    %215 = vmatprep.subr.mxu0 0.0
    %216 = vmatpush1.msra.mxu0 0.0
    %217 = vmatprep.subr.mxu0 0.0
    %218 = vmatpush1.msra.mxu0 0.0
    %219 = vmatprep.subr.mxu0 0.0
    %220 = vmatpush1.msra.mxu0 0.0
    %221 = vmatprep.subr.mxu0 0.0
    %222 = vmatpush1.msra.mxu0 0.0
    %223 = vmatprep.subr.mxu0 0.0
    %224 = vmatpush1.msra.mxu0 0.0
    %225 = vmatprep.subr.mxu0 0.0
    %226 = vmatpush1.msra.mxu0 0.0
    %227 = vmatprep.subr.mxu0 0.0
    %228 = vmatpush1.msra.mxu0 0.0
    %229 = vmatprep.subr.mxu0 0.0
    %230 = vmatpush1.msra.mxu0 0.0
    %231 = vmatprep.subr.mxu0 0.0
    %232 = vmatpush1.msra.mxu0 0.0
    %233 = vmatprep.subr.mxu0 0.0
    %234 = vmatpush1.msra.mxu0 0.0
    %235 = vmatprep.subr.mxu0 0.0
    %236 = vmatpush1.msra.mxu0 0.0
    %237 = vmatprep.subr.mxu0 0.0
    %238 = vmatpush1.msra.mxu0 0.0
    %239 = vmatprep.subr.mxu0 0.0
    %240 = vmatpush1.msra.mxu0 0.0
    %241 = vmatprep.mubr.f32.mxu0 0.0
    %242 = vmatmul.mubr.f32.gmra.mrb[0].mxu0 %v174
    %v243 = vpop.f32.mrb[0].mxu0
    %v244 = vadd.f32 0.0, %v243
    %v245 = vpop.f32.mrb[0].mxu0
    %246 = vdwg.mxu0
    %v247 = vadd.f32 %v176, %v244
    %v248 = vtanh.pop %v247
    %vm249 = vcmp.le.s32.totalorder %v93, 1
    %vm250 = vcmp.gt.s32.totalorder %v94, 1
    %vm251 = vmand %vm249, %vm250
    %v252 = vsel %vm251, %v248, 0.0
    %s253 = scalar_lea.vmem [#allocation10], 8
    %254 = vst [vmem:[%s253] sm:$0xff] %v252
    %v255 = vsel %vm251, %v248, %v174
    %s256 = scalar_lea.vmem [#allocation2], 16
    %v257 = vld [vmem:[%s256] sm:$0xff]
    %258 = vmatprep.subr.mxu0 0.0
    %259 = vmatpush1.msra.mxu0 %v69
    %260 = vmatprep.subr.mxu0 0.0
    %261 = vmatpush1.msra.mxu0 %v70
    %262 = vmatprep.subr.mxu0 0.0
    %263 = vmatpush1.msra.mxu0 %v71
    %264 = vmatprep.subr.mxu0 0.0
    %265 = vmatpush1.msra.mxu0 %v72
    %266 = vmatprep.subr.mxu0 0.0
    %267 = vmatpush1.msra.mxu0 %v73
    %268 = vmatprep.subr.mxu0 0.0
    %269 = vmatpush1.msra.mxu0 %v74
    %270 = vmatprep.subr.mxu0 0.0
    %271 = vmatpush1.msra.mxu0 %v75
    %272 = vmatprep.subr.mxu0 0.0
    %273 = vmatpush1.msra.mxu0 %v76
    %274 = vmatprep.subr.mxu0 0.0
    %275 = vmatpush1.msra.mxu0 %v77
    %276 = vmatprep.subr.mxu0 0.0
    %277 = vmatpush1.msra.mxu0 %v78
    %278 = vmatprep.subr.mxu0 0.0
    %279 = vmatpush1.msra.mxu0 %v79
    %280 = vmatprep.subr.mxu0 0.0
    %281 = vmatpush1.msra.mxu0 %v80
    %282 = vmatprep.subr.mxu0 0.0
    %283 = vmatpush1.msra.mxu0 %v81
    %284 = vmatprep.subr.mxu0 0.0
    %285 = vmatpush1.msra.mxu0 %v82
    %286 = vmatprep.subr.mxu0 0.0
    %287 = vmatpush1.msra.mxu0 %v83
    %288 = vmatprep.subr.mxu0 0.0
    %289 = vmatpush1.msra.mxu0 %v84
    %290 = vmatprep.subr.mxu0 0.0
    %291 = vmatpush1.msra.mxu0 0.0
    %292 = vmatprep.subr.mxu0 0.0
    %293 = vmatpush1.msra.mxu0 0.0
    %294 = vmatprep.subr.mxu0 0.0
    %295 = vmatpush1.msra.mxu0 0.0
    %296 = vmatprep.subr.mxu0 0.0
    %297 = vmatpush1.msra.mxu0 0.0
    %298 = vmatprep.subr.mxu0 0.0
    %299 = vmatpush1.msra.mxu0 0.0
    %300 = vmatprep.subr.mxu0 0.0
    %301 = vmatpush1.msra.mxu0 0.0
    %302 = vmatprep.subr.mxu0 0.0
    %303 = vmatpush1.msra.mxu0 0.0
    %304 = vmatprep.subr.mxu0 0.0
    %305 = vmatpush1.msra.mxu0 0.0
    %306 = vmatprep.subr.mxu0 0.0
    %307 = vmatpush1.msra.mxu0 0.0
    %308 = vmatprep.subr.mxu0 0.0
    %309 = vmatpush1.msra.mxu0 0.0
    %310 = vmatprep.subr.mxu0 0.0
    %311 = vmatpush1.msra.mxu0 0.0
    %312 = vmatprep.subr.mxu0 0.0
    %313 = vmatpush1.msra.mxu0 0.0
    %314 = vmatprep.subr.mxu0 0.0
    %315 = vmatpush1.msra.mxu0 0.0
    %316 = vmatprep.subr.mxu0 0.0
    %317 = vmatpush1.msra.mxu0 0.0
    %318 = vmatprep.subr.mxu0 0.0
    %319 = vmatpush1.msra.mxu0 0.0
    %320 = vmatprep.subr.mxu0 0.0
    %321 = vmatpush1.msra.mxu0 0.0
    %322 = vmatprep.mubr.f32.mxu0 0.0
    %323 = vmatmul.mubr.f32.gmra.mrb[0].mxu0 %v255
    %v324 = vpop.f32.mrb[0].mxu0
    %v325 = vadd.f32 0.0, %v324
    %v326 = vpop.f32.mrb[0].mxu0
    %327 = vdwg.mxu0
    %v328 = vadd.f32 %v257, %v325
    %v329 = vtanh.pop %v328
    %vm330 = vcmp.le.s32.totalorder %v93, 2
    %vm331 = vcmp.gt.s32.totalorder %v94, 2
    %vm332 = vmand %vm330, %vm331
    %v333 = vsel %vm332, %v329, 0.0
    %s334 = scalar_lea.vmem [#allocation10], 16
    %335 = vst [vmem:[%s334] sm:$0xff] %v333
    %v336 = vsel %vm332, %v329, %v255
    %s337 = scalar_lea.vmem [#allocation2], 24
    %v338 = vld [vmem:[%s337] sm:$0xff]
    %339 = vmatprep.subr.mxu0 0.0
    %340 = vmatpush1.msra.mxu0 %v69
    %341 = vmatprep.subr.mxu0 0.0
    %342 = vmatpush1.msra.mxu0 %v70
    %343 = vmatprep.subr.mxu0 0.0
    %344 = vmatpush1.msra.mxu0 %v71
    %345 = vmatprep.subr.mxu0 0.0
    %346 = vmatpush1.msra.mxu0 %v72
    %347 = vmatprep.subr.mxu0 0.0
    %348 = vmatpush1.msra.mxu0 %v73
    %349 = vmatprep.subr.mxu0 0.0
    %350 = vmatpush1.msra.mxu0 %v74
    %351 = vmatprep.subr.mxu0 0.0
    %352 = vmatpush1.msra.mxu0 %v75
    %353 = vmatprep.subr.mxu0 0.0
    %354 = vmatpush1.msra.mxu0 %v76
    %355 = vmatprep.subr.mxu0 0.0
    %356 = vmatpush1.msra.mxu0 %v77
    %357 = vmatprep.subr.mxu0 0.0
    %358 = vmatpush1.msra.mxu0 %v78
    %359 = vmatprep.subr.mxu0 0.0
    %360 = vmatpush1.msra.mxu0 %v79
    %361 = vmatprep.subr.mxu0 0.0
    %362 = vmatpush1.msra.mxu0 %v80
    %363 = vmatprep.subr.mxu0 0.0
    %364 = vmatpush1.msra.mxu0 %v81
    %365 = vmatprep.subr.mxu0 0.0
    %366 = vmatpush1.msra.mxu0 %v82
    %367 = vmatprep.subr.mxu0 0.0
    %368 = vmatpush1.msra.mxu0 %v83
    %369 = vmatprep.subr.mxu0 0.0
    %370 = vmatpush1.msra.mxu0 %v84
    %371 = vmatprep.subr.mxu0 0.0
    %372 = vmatpush1.msra.mxu0 0.0
    %373 = vmatprep.subr.mxu0 0.0
    %374 = vmatpush1.msra.mxu0 0.0
    %375 = vmatprep.subr.mxu0 0.0
    %376 = vmatpush1.msra.mxu0 0.0
    %377 = vmatprep.subr.mxu0 0.0
    %378 = vmatpush1.msra.mxu0 0.0
    %379 = vmatprep.subr.mxu0 0.0
    %380 = vmatpush1.msra.mxu0 0.0
    %381 = vmatprep.subr.mxu0 0.0
    %382 = vmatpush1.msra.mxu0 0.0
    %383 = vmatprep.subr.mxu0 0.0
    %384 = vmatpush1.msra.mxu0 0.0
    %385 = vmatprep.subr.mxu0 0.0
    %386 = vmatpush1.msra.mxu0 0.0
    %387 = vmatprep.subr.mxu0 0.0
    %388 = vmatpush1.msra.mxu0 0.0
    %389 = vmatprep.subr.mxu0 0.0
    %390 = vmatpush1.msra.mxu0 0.0
    %391 = vmatprep.subr.mxu0 0.0
    %392 = vmatpush1.msra.mxu0 0.0
    %393 = vmatprep.subr.mxu0 0.0
    %394 = vmatpush1.msra.mxu0 0.0
    %395 = vmatprep.subr.mxu0 0.0
    %396 = vmatpush1.msra.mxu0 0.0
    %397 = vmatprep.subr.mxu0 0.0
    %398 = vmatpush1.msra.mxu0 0.0
    %399 = vmatprep.subr.mxu0 0.0
    %400 = vmatpush1.msra.mxu0 0.0
    %401 = vmatprep.subr.mxu0 0.0
    %402 = vmatpush1.msra.mxu0 0.0
    %403 = vmatprep.mubr.f32.mxu0 0.0
    %404 = vmatmul.mubr.f32.gmra.mrb[0].mxu0 %v336
    %v405 = vpop.f32.mrb[0].mxu0
    %v406 = vadd.f32 0.0, %v405
    %v407 = vpop.f32.mrb[0].mxu0
    %408 = vdwg.mxu0
    %v409 = vadd.f32 %v338, %v406
    %v410 = vtanh.pop %v409
    %vm411 = vcmp.le.s32.totalorder %v93, 3
    %vm412 = vcmp.gt.s32.totalorder %v94, 3
    %vm413 = vmand %vm411, %vm412
    %v414 = vsel %vm413, %v410, 0.0
    %s415 = scalar_lea.vmem [#allocation10], 24
    %416 = vst [vmem:[%s415] sm:$0xff] %v414
    %v417 = vsel %vm413, %v410, %v336
    %s418 = scalar_lea.vmem [#allocation2], 32
    %v419 = vld [vmem:[%s418] sm:$0xff]
    %420 = vmatprep.subr.mxu0 0.0
    %421 = vmatpush1.msra.mxu0 %v69
    %422 = vmatprep.subr.mxu0 0.0
    %423 = vmatpush1.msra.mxu0 %v70
    %424 = vmatprep.subr.mxu0 0.0
    %425 = vmatpush1.msra.mxu0 %v71
    %426 = vmatprep.subr.mxu0 0.0
    %427 = vmatpush1.msra.mxu0 %v72
    %428 = vmatprep.subr.mxu0 0.0
    %429 = vmatpush1.msra.mxu0 %v73
    %430 = vmatprep.subr.mxu0 0.0
    %431 = vmatpush1.msra.mxu0 %v74
    %432 = vmatprep.subr.mxu0 0.0
    %433 = vmatpush1.msra.mxu0 %v75
    %434 = vmatprep.subr.mxu0 0.0
    %435 = vmatpush1.msra.mxu0 %v76
    %436 = vmatprep.subr.mxu0 0.0
    %437 = vmatpush1.msra.mxu0 %v77
    %438 = vmatprep.subr.mxu0 0.0
    %439 = vmatpush1.msra.mxu0 %v78
    %440 = vmatprep.subr.mxu0 0.0
    %441 = vmatpush1.msra.mxu0 %v79
    %442 = vmatprep.subr.mxu0 0.0
    %443 = vmatpush1.msra.mxu0 %v80
    %444 = vmatprep.subr.mxu0 0.0
    %445 = vmatpush1.msra.mxu0 %v81
    %446 = vmatprep.subr.mxu0 0.0
    %447 = vmatpush1.msra.mxu0 %v82
    %448 = vmatprep.subr.mxu0 0.0
    %449 = vmatpush1.msra.mxu0 %v83
    %450 = vmatprep.subr.mxu0 0.0
    %451 = vmatpush1.msra.mxu0 %v84
    %452 = vmatprep.subr.mxu0 0.0
    %453 = vmatpush1.msra.mxu0 0.0
    %454 = vmatprep.subr.mxu0 0.0
    %455 = vmatpush1.msra.mxu0 0.0
    %456 = vmatprep.subr.mxu0 0.0
    %457 = vmatpush1.msra.mxu0 0.0
    %458 = vmatprep.subr.mxu0 0.0
    %459 = vmatpush1.msra.mxu0 0.0
    %460 = vmatprep.subr.mxu0 0.0
    %461 = vmatpush1.msra.mxu0 0.0
    %462 = vmatprep.subr.mxu0 0.0
    %463 = vmatpush1.msra.mxu0 0.0
    %464 = vmatprep.subr.mxu0 0.0
    %465 = vmatpush1.msra.mxu0 0.0
    %466 = vmatprep.subr.mxu0 0.0
    %467 = vmatpush1.msra.mxu0 0.0
    %468 = vmatprep.subr.mxu0 0.0
    %469 = vmatpush1.msra.mxu0 0.0
    %470 = vmatprep.subr.mxu0 0.0
    %471 = vmatpush1.msra.mxu0 0.0
    %472 = vmatprep.subr.mxu0 0.0
    %473 = vmatpush1.msra.mxu0 0.0
    %474 = vmatprep.subr.mxu0 0.0
    %475 = vmatpush1.msra.mxu0 0.0
    %476 = vmatprep.subr.mxu0 0.0
    %477 = vmatpush1.msra.mxu0 0.0
    %478 = vmatprep.subr.mxu0 0.0
    %479 = vmatpush1.msra.mxu0 0.0
    %480 = vmatprep.subr.mxu0 0.0
    %481 = vmatpush1.msra.mxu0 0.0
    %482 = vmatprep.subr.mxu0 0.0
    %483 = vmatpush1.msra.mxu0 0.0
    %484 = vmatprep.mubr.f32.mxu0 0.0
    %485 = vmatmul.mubr.f32.gmra.mrb[0].mxu0 %v417
    %v486 = vpop.f32.mrb[0].mxu0
    %v487 = vadd.f32 0.0, %v486
    %v488 = vpop.f32.mrb[0].mxu0
    %489 = vdwg.mxu0
    %v490 = vadd.f32 %v419, %v487
    %v491 = vtanh.pop %v490
    %vm492 = vcmp.le.s32.totalorder %v93, 4
    %vm493 = vcmp.gt.s32.totalorder %v94, 4
    %vm494 = vmand %vm492, %vm493
    %v495 = vsel %vm494, %v491, 0.0
    %s496 = scalar_lea.vmem [#allocation10], 32
    %497 = vst [vmem:[%s496] sm:$0xff] %v495
    %v498 = vsel %vm494, %v491, %v417
    %s499 = scalar_lea.vmem [#allocation2], 40
    %v500 = vld [vmem:[%s499] sm:$0xff]
    %501 = vmatprep.subr.mxu0 0.0
    %502 = vmatpush1.msra.mxu0 %v69
    %503 = vmatprep.subr.mxu0 0.0
    %504 = vmatpush1.msra.mxu0 %v70
    %505 = vmatprep.subr.mxu0 0.0
    %506 = vmatpush1.msra.mxu0 %v71
    %507 = vmatprep.subr.mxu0 0.0
    %508 = vmatpush1.msra.mxu0 %v72
    %509 = vmatprep.subr.mxu0 0.0
    %510 = vmatpush1.msra.mxu0 %v73
    %511 = vmatprep.subr.mxu0 0.0
    %512 = vmatpush1.msra.mxu0 %v74
    %513 = vmatprep.subr.mxu0 0.0
    %514 = vmatpush1.msra.mxu0 %v75
    %515 = vmatprep.subr.mxu0 0.0
    %516 = vmatpush1.msra.mxu0 %v76
    %517 = vmatprep.subr.mxu0 0.0
    %518 = vmatpush1.msra.mxu0 %v77
    %519 = vmatprep.subr.mxu0 0.0
    %520 = vmatpush1.msra.mxu0 %v78
    %521 = vmatprep.subr.mxu0 0.0
    %522 = vmatpush1.msra.mxu0 %v79
    %523 = vmatprep.subr.mxu0 0.0
    %524 = vmatpush1.msra.mxu0 %v80
    %525 = vmatprep.subr.mxu0 0.0
    %526 = vmatpush1.msra.mxu0 %v81
    %527 = vmatprep.subr.mxu0 0.0
    %528 = vmatpush1.msra.mxu0 %v82
    %529 = vmatprep.subr.mxu0 0.0
    %530 = vmatpush1.msra.mxu0 %v83
    %531 = vmatprep.subr.mxu0 0.0
    %532 = vmatpush1.msra.mxu0 %v84
    %533 = vmatprep.subr.mxu0 0.0
    %534 = vmatpush1.msra.mxu0 0.0
    %535 = vmatprep.subr.mxu0 0.0
    %536 = vmatpush1.msra.mxu0 0.0
    %537 = vmatprep.subr.mxu0 0.0
    %538 = vmatpush1.msra.mxu0 0.0
    %539 = vmatprep.subr.mxu0 0.0
    %540 = vmatpush1.msra.mxu0 0.0
    %541 = vmatprep.subr.mxu0 0.0
    %542 = vmatpush1.msra.mxu0 0.0
    %543 = vmatprep.subr.mxu0 0.0
    %544 = vmatpush1.msra.mxu0 0.0
    %545 = vmatprep.subr.mxu0 0.0
    %546 = vmatpush1.msra.mxu0 0.0
    %547 = vmatprep.subr.mxu0 0.0
    %548 = vmatpush1.msra.mxu0 0.0
    %549 = vmatprep.subr.mxu0 0.0
    %550 = vmatpush1.msra.mxu0 0.0
    %551 = vmatprep.subr.mxu0 0.0
    %552 = vmatpush1.msra.mxu0 0.0
    %553 = vmatprep.subr.mxu0 0.0
    %554 = vmatpush1.msra.mxu0 0.0
    %555 = vmatprep.subr.mxu0 0.0
    %556 = vmatpush1.msra.mxu0 0.0
    %557 = vmatprep.subr.mxu0 0.0
    %558 = vmatpush1.msra.mxu0 0.0
    %559 = vmatprep.subr.mxu0 0.0
    %560 = vmatpush1.msra.mxu0 0.0
    %561 = vmatprep.subr.mxu0 0.0
    %562 = vmatpush1.msra.mxu0 0.0
    %563 = vmatprep.subr.mxu0 0.0
    %564 = vmatpush1.msra.mxu0 0.0
    %565 = vmatprep.mubr.f32.mxu0 0.0
    %566 = vmatmul.mubr.f32.gmra.mrb[0].mxu0 %v498
    %v567 = vpop.f32.mrb[0].mxu0
    %v568 = vadd.f32 0.0, %v567
    %v569 = vpop.f32.mrb[0].mxu0
    %570 = vdwg.mxu0
    %v571 = vadd.f32 %v500, %v568
    %v572 = vtanh.pop %v571
    %vm573 = vcmp.le.s32.totalorder %v93, 5
    %vm574 = vcmp.gt.s32.totalorder %v94, 5
    %vm575 = vmand %vm573, %vm574
    %v576 = vsel %vm575, %v572, 0.0
    %s577 = scalar_lea.vmem [#allocation10], 40
    %578 = vst [vmem:[%s577] sm:$0xff] %v576
    %v579 = vsel %vm575, %v572, %v498
    %s580 = scalar_lea.vmem [#allocation2], 48
    %v581 = vld [vmem:[%s580] sm:$0xff]
    %582 = vmatprep.subr.mxu0 0.0
    %583 = vmatpush1.msra.mxu0 %v69
    %584 = vmatprep.subr.mxu0 0.0
    %585 = vmatpush1.msra.mxu0 %v70
    %586 = vmatprep.subr.mxu0 0.0
    %587 = vmatpush1.msra.mxu0 %v71
    %588 = vmatprep.subr.mxu0 0.0
    %589 = vmatpush1.msra.mxu0 %v72
    %590 = vmatprep.subr.mxu0 0.0
    %591 = vmatpush1.msra.mxu0 %v73
    %592 = vmatprep.subr.mxu0 0.0
    %593 = vmatpush1.msra.mxu0 %v74
    %594 = vmatprep.subr.mxu0 0.0
    %595 = vmatpush1.msra.mxu0 %v75
    %596 = vmatprep.subr.mxu0 0.0
    %597 = vmatpush1.msra.mxu0 %v76
    %598 = vmatprep.subr.mxu0 0.0
    %599 = vmatpush1.msra.mxu0 %v77
    %600 = vmatprep.subr.mxu0 0.0
    %601 = vmatpush1.msra.mxu0 %v78
    %602 = vmatprep.subr.mxu0 0.0
    %603 = vmatpush1.msra.mxu0 %v79
    %604 = vmatprep.subr.mxu0 0.0
    %605 = vmatpush1.msra.mxu0 %v80
    %606 = vmatprep.subr.mxu0 0.0
    %607 = vmatpush1.msra.mxu0 %v81
    %608 = vmatprep.subr.mxu0 0.0
    %609 = vmatpush1.msra.mxu0 %v82
    %610 = vmatprep.subr.mxu0 0.0
    %611 = vmatpush1.msra.mxu0 %v83
    %612 = vmatprep.subr.mxu0 0.0
    %613 = vmatpush1.msra.mxu0 %v84
    %614 = vmatprep.subr.mxu0 0.0
    %615 = vmatpush1.msra.mxu0 0.0
    %616 = vmatprep.subr.mxu0 0.0
    %617 = vmatpush1.msra.mxu0 0.0
    %618 = vmatprep.subr.mxu0 0.0
    %619 = vmatpush1.msra.mxu0 0.0
    %620 = vmatprep.subr.mxu0 0.0
    %621 = vmatpush1.msra.mxu0 0.0
    %622 = vmatprep.subr.mxu0 0.0
    %623 = vmatpush1.msra.mxu0 0.0
    %624 = vmatprep.subr.mxu0 0.0
    %625 = vmatpush1.msra.mxu0 0.0
    %626 = vmatprep.subr.mxu0 0.0
    %627 = vmatpush1.msra.mxu0 0.0
    %628 = vmatprep.subr.mxu0 0.0
    %629 = vmatpush1.msra.mxu0 0.0
    %630 = vmatprep.subr.mxu0 0.0
    %631 = vmatpush1.msra.mxu0 0.0
    %632 = vmatprep.subr.mxu0 0.0
    %633 = vmatpush1.msra.mxu0 0.0
    %634 = vmatprep.subr.mxu0 0.0
    %635 = vmatpush1.msra.mxu0 0.0
    %636 = vmatprep.subr.mxu0 0.0
    %637 = vmatpush1.msra.mxu0 0.0
    %638 = vmatprep.subr.mxu0 0.0
    %639 = vmatpush1.msra.mxu0 0.0
    %640 = vmatprep.subr.mxu0 0.0
    %641 = vmatpush1.msra.mxu0 0.0
    %642 = vmatprep.subr.mxu0 0.0
    %643 = vmatpush1.msra.mxu0 0.0
    %644 = vmatprep.subr.mxu0 0.0
    %645 = vmatpush1.msra.mxu0 0.0
    %646 = vmatprep.mubr.f32.mxu0 0.0
    %647 = vmatmul.mubr.f32.gmra.mrb[0].mxu0 %v579
    %v648 = vpop.f32.mrb[0].mxu0
    %v649 = vadd.f32 0.0, %v648
    %v650 = vpop.f32.mrb[0].mxu0
    %651 = vdwg.mxu0
    %v652 = vadd.f32 %v581, %v649
    %v653 = vtanh.pop %v652
    %vm654 = vcmp.le.s32.totalorder %v93, 6
    %vm655 = vcmp.gt.s32.totalorder %v94, 6
    %vm656 = vmand %vm654, %vm655
    %v657 = vsel %vm656, %v653, 0.0
    %s658 = scalar_lea.vmem [#allocation10], 48
    %659 = vst [vmem:[%s658] sm:$0xff] %v657
    %v660 = vsel %vm656, %v653, %v579
    %s661 = scalar_lea.vmem [#allocation2], 56
    %v662 = vld [vmem:[%s661] sm:$0xff]
    %663 = vmatprep.subr.mxu0 0.0
    %664 = vmatpush1.msra.mxu0 %v69
    %665 = vmatprep.subr.mxu0 0.0
    %666 = vmatpush1.msra.mxu0 %v70
    %667 = vmatprep.subr.mxu0 0.0
    %668 = vmatpush1.msra.mxu0 %v71
    %669 = vmatprep.subr.mxu0 0.0
    %670 = vmatpush1.msra.mxu0 %v72
    %671 = vmatprep.subr.mxu0 0.0
    %672 = vmatpush1.msra.mxu0 %v73
    %673 = vmatprep.subr.mxu0 0.0
    %674 = vmatpush1.msra.mxu0 %v74
    %675 = vmatprep.subr.mxu0 0.0
    %676 = vmatpush1.msra.mxu0 %v75
    %677 = vmatprep.subr.mxu0 0.0
    %678 = vmatpush1.msra.mxu0 %v76
    %679 = vmatprep.subr.mxu0 0.0
    %680 = vmatpush1.msra.mxu0 %v77
    %681 = vmatprep.subr.mxu0 0.0
    %682 = vmatpush1.msra.mxu0 %v78
    %683 = vmatprep.subr.mxu0 0.0
    %684 = vmatpush1.msra.mxu0 %v79
    %685 = vmatprep.subr.mxu0 0.0
    %686 = vmatpush1.msra.mxu0 %v80
    %687 = vmatprep.subr.mxu0 0.0
    %688 = vmatpush1.msra.mxu0 %v81
    %689 = vmatprep.subr.mxu0 0.0
    %690 = vmatpush1.msra.mxu0 %v82
    %691 = vmatprep.subr.mxu0 0.0
    %692 = vmatpush1.msra.mxu0 %v83
    %693 = vmatprep.subr.mxu0 0.0
    %694 = vmatpush1.msra.mxu0 %v84
    %695 = vmatprep.subr.mxu0 0.0
    %696 = vmatpush1.msra.mxu0 0.0
    %697 = vmatprep.subr.mxu0 0.0
    %698 = vmatpush1.msra.mxu0 0.0
    %699 = vmatprep.subr.mxu0 0.0
    %700 = vmatpush1.msra.mxu0 0.0
    %701 = vmatprep.subr.mxu0 0.0
    %702 = vmatpush1.msra.mxu0 0.0
    %703 = vmatprep.subr.mxu0 0.0
    %704 = vmatpush1.msra.mxu0 0.0
    %705 = vmatprep.subr.mxu0 0.0
    %706 = vmatpush1.msra.mxu0 0.0
    %707 = vmatprep.subr.mxu0 0.0
    %708 = vmatpush1.msra.mxu0 0.0
    %709 = vmatprep.subr.mxu0 0.0
    %710 = vmatpush1.msra.mxu0 0.0
    %711 = vmatprep.subr.mxu0 0.0
    %712 = vmatpush1.msra.mxu0 0.0
    %713 = vmatprep.subr.mxu0 0.0
    %714 = vmatpush1.msra.mxu0 0.0
    %715 = vmatprep.subr.mxu0 0.0
    %716 = vmatpush1.msra.mxu0 0.0
    %717 = vmatprep.subr.mxu0 0.0
    %718 = vmatpush1.msra.mxu0 0.0
    %719 = vmatprep.subr.mxu0 0.0
    %720 = vmatpush1.msra.mxu0 0.0
    %721 = vmatprep.subr.mxu0 0.0
    %722 = vmatpush1.msra.mxu0 0.0
    %723 = vmatprep.subr.mxu0 0.0
    %724 = vmatpush1.msra.mxu0 0.0
    %725 = vmatprep.subr.mxu0 0.0
    %726 = vmatpush1.msra.mxu0 0.0
    %727 = vmatprep.mubr.f32.mxu0 0.0
    %728 = vmatmul.mubr.f32.gmra.mrb[0].mxu0 %v660
    %v729 = vpop.f32.mrb[0].mxu0
    %v730 = vadd.f32 0.0, %v729
    %v731 = vpop.f32.mrb[0].mxu0
    %732 = vdwg.mxu0
    %v733 = vadd.f32 %v662, %v730
    %v734 = vtanh.pop %v733
    %vm735 = vcmp.le.s32.totalorder %v93, 7
    %vm736 = vcmp.gt.s32.totalorder %v94, 7
    %vm737 = vmand %vm735, %vm736
    %v738 = vsel %vm737, %v734, 0.0
    %s739 = scalar_lea.vmem [#allocation10], 56
    %740 = vst [vmem:[%s739] sm:$0xff] %v738
    // Predicated region
    $region34: #{shifted_birnn.1} parent=1 // pred_check
      _
    $region35: #{shifted_birnn.1} parent=1 // pred_check_branch
      %742 = sbr.rel (0) target = $region37
    $region36: #{shifted_birnn.1} parent=1 // pred_region
      %s744 = ssub.s32 1024, 1024
      %745 = vsyncadd [#allocation4], %s744
      %s746 = sshll.u32 [#allocation10], 4
      %s747 = int_to_ptr.vmem [resolvable:$true] %s746
      %752 = dma.vmem_to_hbm [thread:$0]  %s747, 1024, %s4, [#allocation4], 128, 128, 8
    $region37: #{shifted_birnn.1} parent=1 // pred_fallthru
      _
    // Predicated region
    $region38: #{shifted_birnn.1} parent=1 // pred_check
      _
    $region39: #{shifted_birnn.1} parent=1 // pred_check_branch
      %754 = sbr.rel (0) target = $region41
    $region40: #{shifted_birnn.1} parent=1 // pred_region
      %755 = dma.done [#allocation4], 1024
    $region41: #{shifted_birnn.1} parent=1 // pred_fallthru
      _
    %756 = vsyncpa [#allocation3], 1
    %757 = vsyncpa [#allocation6], 1
    %758 = vsyncpa [#allocation9], 1
    %759 = vsyncpa [#allocation4], 1

</llo_original>
